<compile_context>
chip_gen: v7x
topology: tpu7x:2x2x1
jax: 0.10.0
libtpu: 0.0.40
codegen_flags: <defaults>
</compile_context>

<pallas_src>
import functools

import jax
import jax.numpy as jnp
from jax.experimental import pallas as pl
from jax.experimental.pallas import tpu as pltpu

EPS = 1e-6


def _round_up(a, b):
    return (a + b - 1) // b * b


def _sublane_multiple(itemsize):
    # f32 -> 8, bf16/f16 -> 16, int8/fp8 -> 32 (sub-32-bit packs along sublanes)
    return 8 * max(1, 4 // int(itemsize))


def _pick_tile_nc(nc, hw, itemsize):
    """Rows (channel maps) per grid step.

    Budget covers the 2x double-buffered native-dtype input tiles PLUS ~3
    f32-sized elementwise temps per row (upcast / clamp / x**p), so the whole
    pipeline stays well under 48 MiB even on v7x (64 MiB physical VMEM / TC).
    Also capped so there are >= 2 grid steps whenever NC allows it, so both
    v7x TensorCores get work.
    """
    sub = _sublane_multiple(itemsize)
    lane_in = _round_up(hw, 128) * int(itemsize)
    lane_f32 = _round_up(hw, 128) * 4
    per_row = 2 * lane_in + 3 * lane_f32
    budget = 24 * 1024 * 1024
    tile = max(sub, (budget // per_row) // sub * sub)
    # >= 2 tiles whenever possible (megacore sharding on v7x).
    tile = min(tile, max(sub, _round_up(pl.cdiv(nc, 2), sub)))
    # Never bigger than the (sublane-rounded) problem.
    tile = min(tile, _round_up(nc, sub))
    return tile


def _vmem_limit_bytes():
    # Generation-aware scoped-VMEM limit: 3/4 of physical, capped at 96 MiB.
    # v5e/v6e (128 MiB physical) -> 96 MiB; v7x (64 MiB per TC) -> 48 MiB.
    try:
        cap = int(pltpu.get_tpu_info().vmem_capacity_bytes)
    except Exception:
        cap = 64 * 1024 * 1024
    return min(cap * 3 // 4, 96 * 1024 * 1024)


def _int_pow(x, n):
    """x**n for a static positive int n, using only VPU multiplies."""
    result = None
    base = x
    m = int(n)
    while m > 0:
        if m & 1:
            result = base if result is None else result * base
        m >>= 1
        if m:
            base = base * base
    return result


def _gem_kernel(p_ref, x_ref, o_ref, *, hw, tile_nc, nc_total, int_p):
    # p_ref: (1,) f32 in SMEM (learnable exponent; unused on the int_p path)
    # x_ref: (tile_nc, hw) native-dtype tile in VMEM
    # o_ref: (1, 1, tile_nc) f32 lane-dense row of per-channel results
    x = x_ref[...].astype(jnp.float32)            # upcast in-kernel (f32 math)
    xc = jnp.maximum(x, EPS)                      # clamp(min=eps)

    if int_p is not None:
        xp = _int_pow(xc, int_p)                  # VPU only: no per-element EUP
        inv_p = 1.0 / float(int_p)
    else:
        p = p_ref[0]
        xp = jnp.exp(p * jnp.log(xc))             # general path: 2 EUP/element
        inv_p = 1.0 / p

    # Lane reduction masked to the logical hw extent (pad lanes never leak).
    s = jnp.sum(xp, axis=-1)                      # (tile_nc,)
    mean = s * (1.0 / hw)                         # avg_pool2d over full H*W
    o = jnp.exp(jnp.log(mean) * inv_p)            # mean**(1/p): tile_nc EUP ops only
    o3 = o.reshape(1, 1, tile_nc)

    if nc_total % tile_nc != 0:
        # Partial last block: rows past NC were read from undefined (OOB) data;
        # zero them so only clean numbers reach HBM (they are sliced off later).
        lane = jax.lax.broadcasted_iota(jnp.int32, (1, 1, tile_nc), 2)
        row = pl.program_id(0) * tile_nc + lane
        o3 = jnp.where(row < nc_total, o3, 0.0)

    o_ref[...] = o3


def _concrete_int_p(p):
    """If p is a concrete integer-valued exponent, return it as a Python int."""
    try:
        pv = float(jax.device_get(jnp.asarray(p)).reshape(-1)[0])
    except Exception:
        return None    # traced (under jit/grad) -> general exp/log path
    ip = int(round(pv))
    if abs(pv - ip) < 1e-12 and 1 <= ip <= 16:
        return ip
    return None


def gem_pallas(x, p):
    """x: (N, C, H, W), p: (1,)  ->  (N, C, 1, 1), matching GeM.forward."""
    N, C, H, W = x.shape
    NC, HW = N * C, H * W
    itemsize = jnp.dtype(x.dtype).itemsize

    x2d = x.reshape(NC, HW)                       # free reshape, NATIVE dtype
    p_arr = jnp.asarray(p, dtype=jnp.float32).reshape(1)
    int_p = _concrete_int_p(p)

    tile_nc = _pick_tile_nc(NC, HW, itemsize)
    num_tiles = pl.cdiv(NC, tile_nc)

    # TODO(synk): for tiny spatial maps (HW << 128, e.g. 7x7) packing
    # k = 128 // HW channels per row with a segmented lane reduce would raise
    # lane/DMA occupancy ~2x; skipped to keep the reduction simple.
    # TODO(synk): for extremely large spatial maps (a single row exceeding the
    # VMEM budget) a second "arbitrary" HW-reduction grid axis with a VMEM
    # accumulator would be needed; typical GeM feature maps never hit this.

    kernel = functools.partial(_gem_kernel, hw=HW, tile_nc=tile_nc,
                               nc_total=NC, int_p=int_p)

    if int_p is not None:
        flops = (int_p + 1) * NC * HW
        transcendentals = 2 * NC
    else:
        flops = 3 * NC * HW
        transcendentals = 2 * NC * HW + 2 * NC
    cost = pl.CostEstimate(
        flops=int(flops),
        transcendentals=int(transcendentals),
        bytes_accessed=int(NC * HW * itemsize + NC * 4 + 4),
    )

    out3d = pl.pallas_call(
        kernel,
        out_shape=jax.ShapeDtypeStruct((num_tiles, 1, tile_nc), jnp.float32),
        grid=(num_tiles,),
        in_specs=[
            pl.BlockSpec(memory_space=pltpu.MemorySpace.SMEM),        # p (scalar)
            # If xprof shows DMA gaps on v7x, add pipeline_mode=pl.Buffered(3).
            pl.BlockSpec((tile_nc, HW), lambda i: (i, 0)),            # x row tile
        ],
        out_specs=pl.BlockSpec((1, 1, tile_nc), lambda i: (i, 0, 0)), # lane-dense
        compiler_params=pltpu.CompilerParams(
            dimension_semantics=("parallel",),     # shard NC tiles across TCs
            vmem_limit_bytes=_vmem_limit_bytes(),
        ),
        cost_estimate=cost,
    )(p_arr, x2d)

    out = out3d.reshape(num_tiles * tile_nc)[:NC].reshape(N, C, 1, 1)
    return out.astype(x.dtype)


def gem_ref(x, p):
    """Pure-JAX reference matching the PyTorch forward."""
    pp = p.reshape(())
    xc = jnp.maximum(x, EPS)
    return jnp.mean(xc ** pp, axis=(-2, -1), keepdims=True) ** (1.0 / pp)


if __name__ == "__main__":
    key = jax.random.PRNGKey(0)
    k1, k2, k3 = jax.random.split(key, 3)

    # GeM.__init__: self.p = Parameter(torch.ones(1) * 3)
    p3 = jnp.ones((1,), dtype=jnp.float32) * 3.0

    # 1) Default p=3 (integer VPU fast path), f32, HW multiple of 128.
    x1 = jax.random.uniform(k1, (2, 4, 16, 16), dtype=jnp.float32,
                            minval=0.0, maxval=2.0)
    out1 = gem_pallas(x1, p3)
    jax.block_until_ready(out1)
    ref1 = gem_ref(x1, p3)
    assert out1.shape == (2, 4, 1, 1)
    assert jnp.allclose(out1, ref1, rtol=1e-4, atol=1e-5), (out1, ref1)

    # 2) 7x7 spatial (HW=49 -> masked lane reduce) and NC=15 -> partial last
    #    block with no HBM padding (tail rows masked in-kernel).
    x2 = jax.random.uniform(k2, (3, 5, 7, 7), dtype=jnp.float32,
                            minval=0.0, maxval=2.0)
    out2 = gem_pallas(x2, p3)
    jax.block_until_ready(out2)
    ref2 = gem_ref(x2, p3)
    assert out2.shape == (3, 5, 1, 1)
    assert jnp.allclose(out2, ref2, rtol=1e-4, atol=1e-5), (out2, ref2)

    # 3) bf16 feature map with non-integer p: native-dtype streaming into the
    #    kernel, f32 math inside, general exp/log path.
    p25 = jnp.asarray([2.5], dtype=jnp.float32)
    x3 = jax.random.uniform(k3, (4, 8, 14, 14), dtype=jnp.float32,
                            minval=0.0, maxval=2.0).astype(jnp.bfloat16)
    out3 = gem_pallas(x3, p25)
    jax.block_until_ready(out3)
    ref3 = gem_ref(x3.astype(jnp.float32), p25)
    assert out3.shape == (4, 8, 1, 1)
    assert jnp.allclose(out3.astype(jnp.float32), ref3, rtol=2e-2, atol=2e-2), (out3, ref3)

    print("KERNEL_OK")
</pallas_src>

<mosaic_0001>
module attributes {stable_mosaic.version = 11 : i64} {
  func.func @_gem_kernel(%arg0: i32, %arg1: memref<1xf32, #tpu.memory_space<smem>>, %arg2: memref<8x256xf32, #tpu.memory_space<vmem>>, %arg3: memref<1x1x8xf32, #tpu.memory_space<vmem>>) attributes {dimension_semantics = [#tpu.dimension_semantics<parallel>], iteration_bounds = array<i64: 1>, scalar_prefetch = 0 : i64, scratch_operands = 0 : i64, tpu.core_type = #tpu.core_type<tc>, window_params = [{transform_indices = @transform_0, window_bounds = array<i64: 1>}, {transform_indices = @transform_1, window_bounds = array<i64: 8, 256>}, {transform_indices = @transform_2, window_bounds = array<i64: 1, 1, 8>}]} {
    %c0 = arith.constant 0 : index
    %c0_0 = arith.constant 0 : index
    %0 = vector.load %arg2[%c0, %c0_0] : memref<8x256xf32, #tpu.memory_space<vmem>>, vector<8x256xf32>
    %cst = arith.constant 9.99999997E-7 : f32
    %1 = vector.broadcast %cst : f32 to vector<8x256xf32>
    %2 = arith.maximumf %0, %1 : vector<8x256xf32>
    %3 = arith.mulf %2, %2 : vector<8x256xf32>
    %4 = arith.mulf %2, %3 : vector<8x256xf32>
    %cst_1 = arith.constant dense<0.000000e+00> : vector<8xf32>
    %5 = vector.multi_reduction <add>, %4, %cst_1 [1] : vector<8x256xf32> to vector<8xf32>
    %cst_2 = arith.constant 3.906250e-03 : f32
    %6 = vector.broadcast %cst_2 : f32 to vector<8xf32>
    %7 = arith.mulf %5, %6 : vector<8xf32>
    %8 = math.log %7 : vector<8xf32>
    %cst_3 = arith.constant 0.333333343 : f32
    %9 = vector.broadcast %cst_3 : f32 to vector<8xf32>
    %10 = arith.mulf %8, %9 : vector<8xf32>
    %11 = math.exp %10 : vector<8xf32>
    %12 = vector.shape_cast %11 : vector<8xf32> to vector<1x1x8xf32>
    %c0_4 = arith.constant 0 : index
    %c0_5 = arith.constant 0 : index
    %c0_6 = arith.constant 0 : index
    %13 = vector.load %arg3[%c0_4, %c0_5, %c0_6] : memref<1x1x8xf32, #tpu.memory_space<vmem>>, vector<1x1x8xf32>
    tpu.vector_store %arg3[%c0_4, %c0_5, %c0_6], %12 {strides = array<i32>} : memref<1x1x8xf32, #tpu.memory_space<vmem>>, vector<1x1x8xf32>,
    return
  }
  func.func @transform_0(%arg0: i32) -> i32 {
    %c0_i32 = arith.constant 0 : i32
    %c0_i32_0 = arith.constant 0 : i32
    return %c0_i32 : i32
  }
  func.func @transform_1(%arg0: i32) -> (i32, i32) {
    %c0_i32 = arith.constant 0 : i32
    %c0_i32_0 = arith.constant 0 : i32
    return %arg0, %c0_i32 : i32, i32
  }
  func.func @transform_2(%arg0: i32) -> (i32, i32, i32) {
    %c0_i32 = arith.constant 0 : i32
    %c0_i32_0 = arith.constant 0 : i32
    %c0_i32_1 = arith.constant 0 : i32
    return %arg0, %c0_i32, %c0_i32_0 : i32, i32, i32
  }
}

</mosaic_0001>

<llo_original>
// kernel: tpu_custom_call.1
$region0: #{tpu_custom_call.1}
  #allocation0 [shape = 'u32[]', space=smem, size = 0x4, offset = 0x4, fixed_abs, tag = 'smem constant byte address 0x4 - core index']
  #allocation1 [shape = 'u32[144,128]{1,0:T(1,128)}', space=vmem, size = 0x12000, scoped, tag = 'internal scratch']
  #allocation2 [shape = 'f32[1]{0:T(128)S(6)}', space=smem, size = 0x200, scoped, tag = 'scoped memory for tpu_custom_call.1']
  %s0 = inlined_call_operand.<no memory space> [shape: f32[1], index: 0, kind: input, shape index: {}]
  %s1 = inlined_call_operand.hbm [shape: f32[8,256], index: 1, kind: input, shape index: {}]
  %s2 = inlined_call_operand.hbm [shape: f32[1,1,8], index: 2, kind: output, shape index: {}]
  %s3 = sld [smem:[#allocation0]]
  $region22: #{tpu_custom_call.1} parent=0
    _
  %s5 = ssub.s32 1, %s3
  %s6 = scalar_select 0, %s5, %s3
  %7 = sst [smem:[#allocation2]] %s0
  $region1: #{tpu_custom_call.1} parent=0
    #allocation3 [shape = 'u8[8192]{0}', space=vmem, size = 0x2000, scoped, tag = 'input window, operand 1, single buffered']
    #allocation4 [shape = 's32[1]{0}', space=sflag, size = 0x4, scoped, tag = 'scoped memory for tpu_custom_call.1']
    #allocation5 [shape = 's32[1]{0}', space=sflag, size = 0x4, scoped, tag = 'scoped memory for tpu_custom_call.1']
    #allocation6 [shape = 'u8[512]{0}', space=vmem, size = 0x400, scoped, tag = 'output window, operand 0, single buffered']
    %8 = vsyncpa [#allocation4], 0
    %9 = vsyncpa [#allocation5], 0
    // Predicated region
    $region2: #{tpu_custom_call.1} parent=1 // pred_check
      _
    $region3: #{tpu_custom_call.1} parent=1 // pred_check_branch
      %11 = sbr.rel (0) target = $region5
    $region4: #{tpu_custom_call.1} parent=1 // pred_region
      _
    $region5: #{tpu_custom_call.1} parent=1 // pred_fallthru
      _
    // Predicated region
    $region6: #{tpu_custom_call.1} parent=1 // pred_check
      _
    $region7: #{tpu_custom_call.1} parent=1 // pred_check_branch
      %13 = sbr.rel (0) target = $region9
    $region8: #{tpu_custom_call.1} parent=1 // pred_region
      %s15 = ssub.s32 256, 256
      %16 = vsyncadd [#allocation4], %s15
      %s18 = sshll.u32 [#allocation3], 4
      %s19 = int_to_ptr.vmem [resolvable:$true] %s18
      %21 = dma.hbm_to_vmem [thread:$0]  %s1, 256, %s19, [#allocation4]
    $region9: #{tpu_custom_call.1} parent=1 // pred_fallthru
      _
    // Predicated region
    $region10: #{tpu_custom_call.1} parent=1 // pred_check
      _
    $region11: #{tpu_custom_call.1} parent=1 // pred_check_branch
      %23 = sbr.rel (0) target = $region13
    $region12: #{tpu_custom_call.1} parent=1 // pred_region
      %24 = dma.done [#allocation4], 256
    $region13: #{tpu_custom_call.1} parent=1 // pred_fallthru
      _
    %v25 = vld [vmem:[#allocation3] sm:$0xff]
    %v26 = vld [vmem:[#allocation3 + $0x8] sm:$0xff]
    %v27 = vmax.f32 %v25, 1e-06
    %v28 = vmax.f32 %v26, 1e-06
    %v29 = vmul.f32 %v27, %v27
    %v30 = vmul.f32 %v28, %v28
    %v31 = vmul.f32 %v27, %v29
    %v32 = vmul.f32 %v28, %v30
    %v33 = vadd.f32 %v31, %v32
    %34 = vadd.xlane.f32.xlu0 %v33
    %v35 = vpop.xlane.xlu0 %34
    %v36 = vmul.f32 %v35, 0.00390625
    %v37 = vlog2.pop %v36
    %v38 = vmul.f32 %v37, 0.6931472
    %v39 = vmul.f32 %v38, 0.33333334
    %v40 = vmul.f32 %v39, 1.442695
    %v41 = vpow.pop %v40
    %v43 = vlaneseq
    %v44 = vand.u32 %v43, 127
    %v45 = vlaneseq
    %v46 = vshrl.u32 %v45, 7
    %v47 = vsub.s32 %v44, %v46
    %v48 = vrot.slane %v41, %v47
    %vm50 = vcmask 57344
    %51 = vst.msk [vmem:[#allocation6] sm:$0x1] %vm50, %v48
    // Predicated region
    $region14: #{tpu_custom_call.1} parent=1 // pred_check
      _
    $region15: #{tpu_custom_call.1} parent=1 // pred_check_branch
      %53 = sbr.rel (0) target = $region17
    $region16: #{tpu_custom_call.1} parent=1 // pred_region
      %s55 = ssub.s32 16, 16
      %56 = vsyncadd [#allocation5], %s55
      %s58 = sshll.u32 [#allocation6], 4
      %s59 = int_to_ptr.vmem [resolvable:$true] %s58
      %61 = dma.vmem_to_hbm [thread:$0]  %s59, 16, %s2, [#allocation5]
    $region17: #{tpu_custom_call.1} parent=1 // pred_fallthru
      _
    // Predicated region
    $region18: #{tpu_custom_call.1} parent=1 // pred_check
      _
    $region19: #{tpu_custom_call.1} parent=1 // pred_check_branch
      %63 = sbr.rel (0) target = $region21
    $region20: #{tpu_custom_call.1} parent=1 // pred_region
      %64 = dma.done [#allocation5], 16
    $region21: #{tpu_custom_call.1} parent=1 // pred_fallthru
      _
    %65 = vsyncpa [#allocation4], 1
    %66 = vsyncpa [#allocation5], 1

</llo_original>
